<compile_context>
chip_gen: v5e
topology: v5e:2x2
jax: 0.10.0
libtpu: 0.0.40
codegen_flags: <defaults>
</compile_context>

<pallas_src>
import functools

import jax
import jax.numpy as jnp
from jax import lax
from jax.experimental import pallas as pl
from jax.experimental.pallas import tpu as pltpu

EPS = 1e-5
_VMEM_LIMIT_BYTES = 48 * 1024 * 1024   # < 64 MiB physical on v7x; fine on v5e/v6e
_VMEM_TILE_BUDGET = 40 * 1024 * 1024   # headroom for double-buffered tiles


def _round_up(x, mult):
    return (x + mult - 1) // mult * mult


def _stats_kernel(patches_ref, w_ref, sum_ref, ssq_ref):
    """Pass 1: per-channel sum / sum-of-squares of conv outputs (MXU GEMM).

    Grid = (2, n_per_core).  Leading axis is "parallel" so v7x's two
    TensorCores each reduce half the M tiles into their own (1, 1, CP)
    partial; the trailing "arbitrary" axis keeps that partial resident.
    """
    i = pl.program_id(1)

    @pl.when(i == 0)
    def _init():
        sum_ref[...] = jnp.zeros_like(sum_ref)
        ssq_ref[...] = jnp.zeros_like(ssq_ref)

    # bf16 x bf16 -> f32 accumulation on the MXU.
    y = jnp.dot(patches_ref[...], w_ref[...], preferred_element_type=jnp.float32)
    sum_ref[...] += jnp.sum(y, axis=0, keepdims=True)[None]
    ssq_ref[...] += jnp.sum(y * y, axis=0, keepdims=True)[None]


def _gemm_bn_relu_kernel(patches_ref, w_ref, sum_ref, ssq_ref, gamma_ref,
                         beta_ref, o_ref, *, inv_m):
    """Pass 2: recompute this tile's GEMM, then BN (global stats) + ReLU.

    Recomputing the GEMM avoids writing/re-reading an f32 (M, CP) intermediate
    through HBM (both passes are bandwidth bound); appropriate while
    K <~ 2*CP.  For much larger K, switch to a bf16 y intermediate instead.
    """
    y = jnp.dot(patches_ref[...], w_ref[...], preferred_element_type=jnp.float32)
    ch_sum = sum_ref[0] + sum_ref[1]          # combine per-core partials (1, CP)
    ch_ssq = ssq_ref[0] + ssq_ref[1]
    mean = ch_sum * inv_m
    # Clamp: E[y^2] - mean^2 can dip slightly negative from rounding.
    var = jnp.maximum(ch_ssq * inv_m - mean * mean, 0.0)
    scale = gamma_ref[...] * lax.rsqrt(var + EPS)   # rsqrt -> EUP slot
    shift = beta_ref[...] - mean * scale
    o_ref[...] = jnp.maximum(y * scale + shift, 0.0)


def cbr_forward(x_nchw, conv_w, conv_b, bn_gamma, bn_beta, *, stride=1,
                tile_m=2048):
    """x_nchw: (N, Cin, H, W); conv_w: (Cout, Cin, KH, KW) — PyTorch layouts."""
    del conv_b  # Exactly cancelled by training-mode BN mean subtraction.

    n, cin, h, w = x_nchw.shape
    cout, _, kh, kw = conv_w.shape
    oh = (h - kh) // stride + 1
    ow = (w - kw) // stride + 1
    m = n * oh * ow
    k = cin * kh * kw
    cp = _round_up(cout, 128)   # lane-dense GEMM N dim / unmasked output stores

    # im2col in bf16 with the (cin, kh, kw) feature axis already last — one
    # fused XLA op, no f32 patch materialization, no extra transpose pass.
    patches = lax.conv_general_dilated_patches(
        x_nchw.astype(jnp.bfloat16), (kh, kw), (stride, stride), "VALID",
        dimension_numbers=("NCHW", "OIHW", "NHWC"))
    patches = patches.reshape(m, k)

    # Tile sizing: big tiles (per-grid-step overhead ~0.35us), capped so the
    # pass-2 double-buffered working set (bf16 patches in + f32 out per row)
    # stays under the budget on every generation, incl. v7x (64 MiB VMEM).
    bytes_per_row = 4 * k + 8 * cp              # 2x(K bf16) + 2x(CP f32)
    budget_rows = max(8, (_VMEM_TILE_BUDGET // bytes_per_row) // 8 * 8)
    tile_m = max(8, min(tile_m, _round_up(pl.cdiv(m, 2), 8), budget_rows))
    n_per_core = pl.cdiv(m, 2 * tile_m)
    n_tiles = 2 * n_per_core
    m_pad = n_tiles * tile_m

    # Zero M-padding rows contribute nothing to the sums (true 1/M is used).
    patches = jnp.pad(patches, ((0, m_pad - m), (0, 0)))
    w_mat = jnp.transpose(conv_w.reshape(cout, k)).astype(jnp.bfloat16)
    w_mat = jnp.pad(w_mat, ((0, 0), (0, cp - cout)))
    gamma = jnp.pad(bn_gamma.astype(jnp.float32), (0, cp - cout)).reshape(1, cp)
    beta = jnp.pad(bn_beta.astype(jnp.float32), (0, cp - cout)).reshape(1, cp)

    cparams1 = pltpu.CompilerParams(
        dimension_semantics=("parallel", "arbitrary"),
        vmem_limit_bytes=_VMEM_LIMIT_BYTES)
    cparams2 = pltpu.CompilerParams(
        dimension_semantics=("parallel",),
        vmem_limit_bytes=_VMEM_LIMIT_BYTES)

    # Pass 1: global per-channel sum / sum-of-squares (two per-core partials).
    ch_sum, ch_ssq = pl.pallas_call(
        _stats_kernel,
        out_shape=(jax.ShapeDtypeStruct((2, 1, cp), jnp.float32),
                   jax.ShapeDtypeStruct((2, 1, cp), jnp.float32)),
        grid_spec=pltpu.PrefetchScalarGridSpec(
            num_scalar_prefetch=0,
            grid=(2, n_per_core),
            in_specs=[
                pl.BlockSpec((tile_m, k), lambda c, i: (c * n_per_core + i, 0)),
                pl.BlockSpec((k, cp), lambda c, i: (0, 0)),
            ],
            out_specs=[
                pl.BlockSpec((1, 1, cp), lambda c, i: (c, 0, 0)),
                pl.BlockSpec((1, 1, cp), lambda c, i: (c, 0, 0)),
            ]),
        compiler_params=cparams1,
    )(patches, w_mat)

    # Pass 2: recompute GEMM per tile + BN (global stats) + ReLU, fused store.
    out_flat = pl.pallas_call(
        functools.partial(_gemm_bn_relu_kernel, inv_m=1.0 / m),
        out_shape=jax.ShapeDtypeStruct((m_pad, cp), jnp.float32),
        grid_spec=pltpu.PrefetchScalarGridSpec(
            num_scalar_prefetch=0,
            grid=(n_tiles,),
            in_specs=[
                pl.BlockSpec((tile_m, k), lambda i: (i, 0)),
                pl.BlockSpec((k, cp), lambda i: (0, 0)),
                pl.BlockSpec((2, 1, cp), lambda i: (0, 0, 0)),
                pl.BlockSpec((2, 1, cp), lambda i: (0, 0, 0)),
                pl.BlockSpec((1, cp), lambda i: (0, 0)),
                pl.BlockSpec((1, cp), lambda i: (0, 0)),
            ],
            out_specs=pl.BlockSpec((tile_m, cp), lambda i: (i, 0))),
        compiler_params=cparams2,
    )(patches, w_mat, ch_sum, ch_ssq, gamma, beta)

    out = out_flat[:m, :cout].reshape(n, oh, ow, cout)
    return jnp.transpose(out, (0, 3, 1, 2))           # back to NCHW, f32


def _reference(x_nchw, conv_w, conv_b, bn_gamma, bn_beta, stride=1):
    y = lax.conv_general_dilated(
        x_nchw.astype(jnp.float32), conv_w.astype(jnp.float32),
        window_strides=(stride, stride), padding="VALID",
        dimension_numbers=("NCHW", "OIHW", "NCHW"))
    y = y + conv_b.reshape(1, -1, 1, 1)
    mean = jnp.mean(y, axis=(0, 2, 3), keepdims=True)
    var = jnp.mean((y - mean) ** 2, axis=(0, 2, 3), keepdims=True)
    y = (y - mean) * lax.rsqrt(var + EPS)
    y = y * bn_gamma.reshape(1, -1, 1, 1) + bn_beta.reshape(1, -1, 1, 1)
    return jnp.maximum(y, 0.0)


if __name__ == "__main__":
    # Shapes consistent with CBR(in_channel=4, out_channel=8, stride=1, kernel_size=3).
    N, CIN, H, W = 2, 4, 16, 16
    COUT, KH, KW, STRIDE = 8, 3, 3, 1

    key = jax.random.PRNGKey(0)
    kx, kw_, kb = jax.random.split(key, 3)
    x = jax.random.normal(kx, (N, CIN, H, W), dtype=jnp.float32)
    conv_w = 0.1 * jax.random.normal(kw_, (COUT, CIN, KH, KW), dtype=jnp.float32)
    conv_b = 0.1 * jax.random.normal(kb, (COUT,), dtype=jnp.float32)
    bn_gamma = jnp.ones((COUT,), dtype=jnp.float32)   # PyTorch BatchNorm2d defaults
    bn_beta = jnp.zeros((COUT,), dtype=jnp.float32)

    cbr = jax.jit(functools.partial(cbr_forward, stride=STRIDE))
    out = cbr(x, conv_w, conv_b, bn_gamma, bn_beta)
    out = jax.block_until_ready(out)

    ref = _reference(x, conv_w, conv_b, bn_gamma, bn_beta, stride=STRIDE)
    assert out.shape == (N, COUT, H - KH + 1, W - KW + 1), out.shape
    max_err = float(jnp.max(jnp.abs(out - ref)))
    # bf16 GEMM operands (f32 accumulation) give ~1e-3-level error after BN
    # normalization; 1e-2 is a comfortably conservative bound.
    assert jnp.allclose(out, ref, rtol=1e-2, atol=1e-2), max_err

    print("KERNEL_OK")
</pallas_src>

<mosaic_0001>
module attributes {stable_mosaic.version = 11 : i64} {
  func.func @_stats_kernel(%arg0: i32, %arg1: i32, %arg2: memref<200x36xbf16, #tpu.memory_space<vmem>>, %arg3: memref<36x128xbf16, #tpu.memory_space<vmem>>, %arg4: memref<1x1x128xf32, #tpu.memory_space<vmem>>, %arg5: memref<1x1x128xf32, #tpu.memory_space<vmem>>) attributes {dimension_semantics = [#tpu.dimension_semantics<parallel>, #tpu.dimension_semantics<arbitrary>], iteration_bounds = array<i64: 2, 1>, scalar_prefetch = 0 : i64, scratch_operands = 0 : i64, tpu.core_type = #tpu.core_type<tc>, window_params = [{transform_indices = @transform_0, window_bounds = array<i64: 200, 36>}, {pipeline_mode = #tpu.pipeline_mode<synchronous>, transform_indices = @transform_1, window_bounds = array<i64: 36, 128>}, {transform_indices = @transform_2, window_bounds = array<i64: 1, 1, 128>}, {transform_indices = @transform_3, window_bounds = array<i64: 1, 1, 128>}]} {
    %c0_i32 = arith.constant 0 : i32
    %0 = arith.cmpi eq, %arg1, %c0_i32 : i32
    %1 = arith.extui %0 : i1 to i32
    %c0_i32_0 = arith.constant 0 : i32
    %2 = arith.cmpi ne, %1, %c0_i32_0 : i32
    scf.if %2 {
      %cst_18 = arith.constant 0.000000e+00 : f32
      %19 = vector.broadcast %cst_18 : f32 to vector<1x1x128xf32>
      %c0_19 = arith.constant 0 : index
      %c0_20 = arith.constant 0 : index
      %c0_21 = arith.constant 0 : index
      %20 = vector.load %arg4[%c0_19, %c0_20, %c0_21] : memref<1x1x128xf32, #tpu.memory_space<vmem>>, vector<1x1x128xf32>
      tpu.vector_store %arg4[%c0_19, %c0_20, %c0_21], %19 {strides = array<i32>} : memref<1x1x128xf32, #tpu.memory_space<vmem>>, vector<1x1x128xf32>,
      %cst_22 = arith.constant 0.000000e+00 : f32
      %21 = vector.broadcast %cst_22 : f32 to vector<1x1x128xf32>
      %c0_23 = arith.constant 0 : index
      %c0_24 = arith.constant 0 : index
      %c0_25 = arith.constant 0 : index
      %22 = vector.load %arg5[%c0_23, %c0_24, %c0_25] : memref<1x1x128xf32, #tpu.memory_space<vmem>>, vector<1x1x128xf32>
      tpu.vector_store %arg5[%c0_23, %c0_24, %c0_25], %21 {strides = array<i32>} : memref<1x1x128xf32, #tpu.memory_space<vmem>>, vector<1x1x128xf32>,
    } else {
    }
    %c0 = arith.constant 0 : index
    %c0_1 = arith.constant 0 : index
    %3 = vector.load %arg2[%c0, %c0_1] : memref<200x36xbf16, #tpu.memory_space<vmem>>, vector<200x36xbf16>
    %c0_2 = arith.constant 0 : index
    %c0_3 = arith.constant 0 : index
    %4 = vector.load %arg3[%c0_2, %c0_3] : memref<36x128xbf16, #tpu.memory_space<vmem>>, vector<36x128xbf16>
    %cst = arith.constant dense<0.000000e+00> : vector<200x128xf32>
    %5 = tpu.matmul %3, %4, %cst {dimension_numbers = #tpu.dot_dimension_numbers<[1], [0], [0], [1], [0, 0, 1, 1], [], []>} : vector<200x36xbf16>, vector<36x128xbf16>, vector<200x128xf32> -> vector<200x128xf32>
    %c0_4 = arith.constant 0 : index
    %c0_5 = arith.constant 0 : index
    %c0_6 = arith.constant 0 : index
    %6 = vector.load %arg4[%c0_4, %c0_5, %c0_6] : memref<1x1x128xf32, #tpu.memory_space<vmem>>, vector<1x1x128xf32>
    %cst_7 = arith.constant dense<0.000000e+00> : vector<128xf32>
    %7 = vector.multi_reduction <add>, %5, %cst_7 [0] : vector<200x128xf32> to vector<128xf32>
    %8 = vector.shape_cast %7 : vector<128xf32> to vector<1x128xf32>
    %9 = vector.shape_cast %8 : vector<1x128xf32> to vector<1x1x128xf32>
    %10 = arith.addf %6, %9 : vector<1x1x128xf32>
    %c0_8 = arith.constant 0 : index
    %c0_9 = arith.constant 0 : index
    %c0_10 = arith.constant 0 : index
    %11 = vector.load %arg4[%c0_8, %c0_9, %c0_10] : memref<1x1x128xf32, #tpu.memory_space<vmem>>, vector<1x1x128xf32>
    tpu.vector_store %arg4[%c0_8, %c0_9, %c0_10], %10 {strides = array<i32>} : memref<1x1x128xf32, #tpu.memory_space<vmem>>, vector<1x1x128xf32>,
    %c0_11 = arith.constant 0 : index
    %c0_12 = arith.constant 0 : index
    %c0_13 = arith.constant 0 : index
    %12 = vector.load %arg5[%c0_11, %c0_12, %c0_13] : memref<1x1x128xf32, #tpu.memory_space<vmem>>, vector<1x1x128xf32>
    %13 = arith.mulf %5, %5 : vector<200x128xf32>
    %cst_14 = arith.constant dense<0.000000e+00> : vector<128xf32>
    %14 = vector.multi_reduction <add>, %13, %cst_14 [0] : vector<200x128xf32> to vector<128xf32>
    %15 = vector.shape_cast %14 : vector<128xf32> to vector<1x128xf32>
    %16 = vector.shape_cast %15 : vector<1x128xf32> to vector<1x1x128xf32>
    %17 = arith.addf %12, %16 : vector<1x1x128xf32>
    %c0_15 = arith.constant 0 : index
    %c0_16 = arith.constant 0 : index
    %c0_17 = arith.constant 0 : index
    %18 = vector.load %arg5[%c0_15, %c0_16, %c0_17] : memref<1x1x128xf32, #tpu.memory_space<vmem>>, vector<1x1x128xf32>
    tpu.vector_store %arg5[%c0_15, %c0_16, %c0_17], %17 {strides = array<i32>} : memref<1x1x128xf32, #tpu.memory_space<vmem>>, vector<1x1x128xf32>,
    return
  }
  func.func @transform_0(%arg0: i32, %arg1: i32) -> (i32, i32) {
    %c1_i32 = arith.constant 1 : i32
    %0 = arith.muli %arg0, %c1_i32 : i32
    %1 = arith.addi %0, %arg1 : i32
    %c0_i32 = arith.constant 0 : i32
    %c0_i32_0 = arith.constant 0 : i32
    return %1, %c0_i32 : i32, i32
  }
  func.func @transform_1(%arg0: i32, %arg1: i32) -> (i32, i32) {
    %c0_i32 = arith.constant 0 : i32
    %c0_i32_0 = arith.constant 0 : i32
    %c0_i32_1 = arith.constant 0 : i32
    return %c0_i32, %c0_i32_0 : i32, i32
  }
  func.func @transform_2(%arg0: i32, %arg1: i32) -> (i32, i32, i32) {
    %c0_i32 = arith.constant 0 : i32
    %c0_i32_0 = arith.constant 0 : i32
    %c0_i32_1 = arith.constant 0 : i32
    return %arg0, %c0_i32, %c0_i32_0 : i32, i32, i32
  }
  func.func @transform_3(%arg0: i32, %arg1: i32) -> (i32, i32, i32) {
    %c0_i32 = arith.constant 0 : i32
    %c0_i32_0 = arith.constant 0 : i32
    %c0_i32_1 = arith.constant 0 : i32
    return %arg0, %c0_i32, %c0_i32_0 : i32, i32, i32
  }
}

module attributes {stable_mosaic.version = 11 : i64} {
  func.func @_gemm_bn_relu_kernel(%arg0: i32, %arg1: memref<200x36xbf16, #tpu.memory_space<vmem>>, %arg2: memref<36x128xbf16, #tpu.memory_space<vmem>>, %arg3: memref<2x1x128xf32, #tpu.memory_space<vmem>>, %arg4: memref<2x1x128xf32, #tpu.memory_space<vmem>>, %arg5: memref<1x128xf32, #tpu.memory_space<vmem>>, %arg6: memref<1x128xf32, #tpu.memory_space<vmem>>, %arg7: memref<200x128xf32, #tpu.memory_space<vmem>>) attributes {dimension_semantics = [#tpu.dimension_semantics<parallel>], iteration_bounds = array<i64: 2>, scalar_prefetch = 0 : i64, scratch_operands = 0 : i64, tpu.core_type = #tpu.core_type<tc>, window_params = [{transform_indices = @transform_0, window_bounds = array<i64: 200, 36>}, {pipeline_mode = #tpu.pipeline_mode<synchronous>, transform_indices = @transform_1, window_bounds = array<i64: 36, 128>}, {pipeline_mode = #tpu.pipeline_mode<synchronous>, transform_indices = @transform_2, window_bounds = array<i64: 2, 1, 128>}, {pipeline_mode = #tpu.pipeline_mode<synchronous>, transform_indices = @transform_3, window_bounds = array<i64: 2, 1, 128>}, {pipeline_mode = #tpu.pipeline_mode<synchronous>, transform_indices = @transform_4, window_bounds = array<i64: 1, 128>}, {pipeline_mode = #tpu.pipeline_mode<synchronous>, transform_indices = @transform_5, window_bounds = array<i64: 1, 128>}, {transform_indices = @transform_6, window_bounds = array<i64: 200, 128>}]} {
    %c0 = arith.constant 0 : index
    %c0_0 = arith.constant 0 : index
    %0 = vector.load %arg1[%c0, %c0_0] : memref<200x36xbf16, #tpu.memory_space<vmem>>, vector<200x36xbf16>
    %c0_1 = arith.constant 0 : index
    %c0_2 = arith.constant 0 : index
    %1 = vector.load %arg2[%c0_1, %c0_2] : memref<36x128xbf16, #tpu.memory_space<vmem>>, vector<36x128xbf16>
    %cst = arith.constant dense<0.000000e+00> : vector<200x128xf32>
    %2 = tpu.matmul %0, %1, %cst {dimension_numbers = #tpu.dot_dimension_numbers<[1], [0], [0], [1], [0, 0, 1, 1], [], []>} : vector<200x36xbf16>, vector<36x128xbf16>, vector<200x128xf32> -> vector<200x128xf32>
    %c0_3 = arith.constant 0 : index
    %c0_4 = arith.constant 0 : index
    %c0_5 = arith.constant 0 : index
    %3 = vector.load %arg3[%c0_3, %c0_4, %c0_5] : memref<2x1x128xf32, #tpu.memory_space<vmem>>, vector<1x1x128xf32>
    %4 = vector.shape_cast %3 : vector<1x1x128xf32> to vector<1x128xf32>
    %c1 = arith.constant 1 : index
    %c0_6 = arith.constant 0 : index
    %c0_7 = arith.constant 0 : index
    %5 = vector.load %arg3[%c1, %c0_6, %c0_7] : memref<2x1x128xf32, #tpu.memory_space<vmem>>, vector<1x1x128xf32>
    %6 = vector.shape_cast %5 : vector<1x1x128xf32> to vector<1x128xf32>
    %7 = arith.addf %4, %6 : vector<1x128xf32>
    %c0_8 = arith.constant 0 : index
    %c0_9 = arith.constant 0 : index
    %c0_10 = arith.constant 0 : index
    %8 = vector.load %arg4[%c0_8, %c0_9, %c0_10] : memref<2x1x128xf32, #tpu.memory_space<vmem>>, vector<1x1x128xf32>
    %9 = vector.shape_cast %8 : vector<1x1x128xf32> to vector<1x128xf32>
    %c1_11 = arith.constant 1 : index
    %c0_12 = arith.constant 0 : index
    %c0_13 = arith.constant 0 : index
    %10 = vector.load %arg4[%c1_11, %c0_12, %c0_13] : memref<2x1x128xf32, #tpu.memory_space<vmem>>, vector<1x1x128xf32>
    %11 = vector.shape_cast %10 : vector<1x1x128xf32> to vector<1x128xf32>
    %12 = arith.addf %9, %11 : vector<1x128xf32>
    %cst_14 = arith.constant 0.00255102036 : f32
    %13 = vector.broadcast %cst_14 : f32 to vector<1x128xf32>
    %14 = arith.mulf %7, %13 : vector<1x128xf32>
    %cst_15 = arith.constant 0.00255102036 : f32
    %15 = vector.broadcast %cst_15 : f32 to vector<1x128xf32>
    %16 = arith.mulf %12, %15 : vector<1x128xf32>
    %17 = arith.mulf %14, %14 : vector<1x128xf32>
    %18 = arith.subf %16, %17 : vector<1x128xf32>
    %cst_16 = arith.constant 0.000000e+00 : f32
    %19 = vector.broadcast %cst_16 : f32 to vector<1x128xf32>
    %20 = arith.maximumf %18, %19 : vector<1x128xf32>
    %c0_17 = arith.constant 0 : index
    %c0_18 = arith.constant 0 : index
    %21 = vector.load %arg5[%c0_17, %c0_18] : memref<1x128xf32, #tpu.memory_space<vmem>>, vector<1x128xf32>
    %cst_19 = arith.constant 9.99999974E-6 : f32
    %22 = vector.broadcast %cst_19 : f32 to vector<1x128xf32>
    %23 = arith.addf %20, %22 : vector<1x128xf32>
    %24 = math.rsqrt %23 : vector<1x128xf32>
    %25 = arith.mulf %21, %24 : vector<1x128xf32>
    %c0_20 = arith.constant 0 : index
    %c0_21 = arith.constant 0 : index
    %26 = vector.load %arg6[%c0_20, %c0_21] : memref<1x128xf32, #tpu.memory_space<vmem>>, vector<1x128xf32>
    %27 = arith.mulf %14, %25 : vector<1x128xf32>
    %28 = arith.subf %26, %27 : vector<1x128xf32>
    %29 = vector.broadcast %25 : vector<1x128xf32> to vector<200x128xf32>
    %30 = arith.mulf %2, %29 : vector<200x128xf32>
    %31 = vector.broadcast %28 : vector<1x128xf32> to vector<200x128xf32>
    %32 = arith.addf %30, %31 : vector<200x128xf32>
    %cst_22 = arith.constant 0.000000e+00 : f32
    %33 = vector.broadcast %cst_22 : f32 to vector<200x128xf32>
    %34 = arith.maximumf %32, %33 : vector<200x128xf32>
    %c0_23 = arith.constant 0 : index
    %c0_24 = arith.constant 0 : index
    %35 = vector.load %arg7[%c0_23, %c0_24] : memref<200x128xf32, #tpu.memory_space<vmem>>, vector<200x128xf32>
    tpu.vector_store %arg7[%c0_23, %c0_24], %34 {strides = array<i32>} : memref<200x128xf32, #tpu.memory_space<vmem>>, vector<200x128xf32>,
    return
  }
  func.func @transform_0(%arg0: i32) -> (i32, i32) {
    %c0_i32 = arith.constant 0 : i32
    %c0_i32_0 = arith.constant 0 : i32
    return %arg0, %c0_i32 : i32, i32
  }
  func.func @transform_1(%arg0: i32) -> (i32, i32) {
    %c0_i32 = arith.constant 0 : i32
    %c0_i32_0 = arith.constant 0 : i32
    %c0_i32_1 = arith.constant 0 : i32
    return %c0_i32, %c0_i32_0 : i32, i32
  }
  func.func @transform_2(%arg0: i32) -> (i32, i32, i32) {
    %c0_i32 = arith.constant 0 : i32
    %c0_i32_0 = arith.constant 0 : i32
    %c0_i32_1 = arith.constant 0 : i32
    %c0_i32_2 = arith.constant 0 : i32
    return %c0_i32, %c0_i32_0, %c0_i32_1 : i32, i32, i32
  }
  func.func @transform_3(%arg0: i32) -> (i32, i32, i32) {
    %c0_i32 = arith.constant 0 : i32
    %c0_i32_0 = arith.constant 0 : i32
    %c0_i32_1 = arith.constant 0 : i32
    %c0_i32_2 = arith.constant 0 : i32
    return %c0_i32, %c0_i32_0, %c0_i32_1 : i32, i32, i32
  }
  func.func @transform_4(%arg0: i32) -> (i32, i32) {
    %c0_i32 = arith.constant 0 : i32
    %c0_i32_0 = arith.constant 0 : i32
    %c0_i32_1 = arith.constant 0 : i32
    return %c0_i32, %c0_i32_0 : i32, i32
  }
  func.func @transform_5(%arg0: i32) -> (i32, i32) {
    %c0_i32 = arith.constant 0 : i32
    %c0_i32_0 = arith.constant 0 : i32
    %c0_i32_1 = arith.constant 0 : i32
    return %c0_i32, %c0_i32_0 : i32, i32
  }
  func.func @transform_6(%arg0: i32) -> (i32, i32) {
    %c0_i32 = arith.constant 0 : i32
    %c0_i32_0 = arith.constant 0 : i32
    return %arg0, %c0_i32 : i32, i32
  }
}

</mosaic_0001>

<llo_original>
// kernel: cbr_forward.2
$region0: #{cbr_forward.2}
  #allocation0 [shape = 'u32[]', space=smem, size = 0x4, offset = 0x4, fixed_abs, tag = 'smem constant byte address 0x4 - core index']
  #allocation1 [shape = 'u32[72,128]{1,0:T(1,128)}', space=vmem, size = 0x9000, scoped, tag = 'internal scratch']
  %s0 = inlined_call_operand.vmem [shape: bf16[400,36], index: 0, kind: input, shape index: {}]
  %s1 = inlined_call_operand.vmem [shape: bf16[36,128], index: 1, kind: input, shape index: {}]
  %s2 = inlined_call_operand.vmem [shape: f32[2,1,128], index: 2, kind: output, shape index: {0}]
  %s3 = inlined_call_operand.vmem [shape: f32[2,1,128], index: 3, kind: output, shape index: {1}]
  %4 = xla_tuple %s2, %s3
  %s5 = sld [smem:[#allocation0]]
  $region53: #{cbr_forward.2} parent=0
    _
  %s7 = ssub.s32 1, %s5
  %s8 = scalar_select 0, %s7, %s5
  loop: start=0, step=1, limit=4
  $region2: #{cbr_forward.2} parent=0 // loop_pre_header
    _
  $region3: #{cbr_forward.2} parent=0 // loop_header
    %s10 = sphi 0, %s14
    %p11 = scmp.ge.s32.totalorder %s10, 4
    %s17 = sphi 0, %s29
    %s18 = sphi 0, %s25
    %s19 = sphi 0, %s17
    %s20 = sphi 0, %s18
    %s21 = sphi 0, %s19
    %s22 = sphi 0, %s20
    %s34 = sphi 0, %s36
    %s37 = sphi 0, %s34
    %s38 = sphi 0, %s37
    %s54 = sphi 0, %s38
    %s58 = sphi 0, %s58
    %s60 = sphi 0, %s58
    %s61 = sphi 0, %s60
    %s75 = sphi 0, %s61
    %s81 = sphi 0, %s83
    %s84 = sphi 0, %s81
    %s85 = sphi 0, %s84
    %s101 = sphi 0, %s85
    %s107 = sphi 0, %s109
    %s110 = sphi 0, %s107
    %s111 = sphi 0, %s110
    %s127 = sphi 0, %s111
  $region4: #{cbr_forward.2} parent=0 // loop_header_branch
    %13 = sbr.rel (%p11) target = $region8
  $region5: #{cbr_forward.2} parent=0 // loop_body
    %s15 = ssub.s32 %s10, 1
    %s16 = ssub.s32 %s10, 2
    %s23 = sadd.s32 1, %s18
    %p24 = scmp.ge.s32.totalorder %s23, 1
    %s25 = scalar_select %p24, 0, %s23
    %s26 = sadd.s32 1, %s17
    %s27 = scalar_select %p24, %s26, %s17
    %p28 = scmp.ge.s32.totalorder %s27, 2
    %s29 = scalar_select %p28, 0, %s27
    %s30 = sadd.s32 %s17, %s18
    %s31 = sadd.s32 %s29, %s25
    %s32 = ssub.s32 %s30, %s31
    %p33 = scmp.eq.s32.totalorder %s32, 0
    %s35 = sadd.s32 %s34, 1
    %s36 = scalar_select %p33, %s34, %s35
    %p39 = pneg %p33
    %p40 = scmp.eq.s32.totalorder %s10, 1
    %p41 = por %p39, %p40
    %p42 = scmp.ne.s32.totalorder %s34, %s37
    %p43 = scmp.eq.s32.totalorder %s10, 0
    %p44 = por %p42, %p43
    %p45 = scmp.ne.s32.totalorder %s34, %s37
    %p46 = scmp.eq.s32.totalorder %s15, 1
    %p47 = por %p45, %p46
    %p48 = scmp.ne.s32.totalorder %s37, %s38
    %p49 = scmp.eq.s32.totalorder %s15, 0
    %p50 = por %p48, %p49
    %p51 = scmp.ne.s32.totalorder %s37, %s38
    %p52 = scmp.eq.s32.totalorder %s16, 1
    %p53 = por %p51, %p52
    %p55 = scmp.ne.s32.totalorder %s38, %s54
    %p56 = scmp.eq.s32.totalorder %s16, 0
    %p57 = por %p55, %p56
    %s59 = sadd.s32 %s58, 1
    %p62 = scmp.eq.s32.totalorder %s10, 1
    %p63 = scmp.ne.s32.totalorder %s58, %s60
    %p64 = scmp.eq.s32.totalorder %s10, 0
    %p65 = por %p63, %p64
    %p66 = scmp.ne.s32.totalorder %s58, %s60
    %p67 = scmp.eq.s32.totalorder %s15, 1
    %p68 = por %p66, %p67
    %p69 = scmp.ne.s32.totalorder %s60, %s61
    %p70 = scmp.eq.s32.totalorder %s15, 0
    %p71 = por %p69, %p70
    %p72 = scmp.ne.s32.totalorder %s60, %s61
    %p73 = scmp.eq.s32.totalorder %s16, 1
    %p74 = por %p72, %p73
    %p76 = scmp.ne.s32.totalorder %s61, %s75
    %p77 = scmp.eq.s32.totalorder %s16, 0
    %p78 = por %p76, %p77
    %s79 = ssub.s32 %s17, %s29
    %p80 = scmp.eq.s32.totalorder %s79, 0
    %s82 = sadd.s32 %s81, 1
    %s83 = scalar_select %p80, %s81, %s82
    %p86 = pneg %p80
    %p87 = scmp.eq.s32.totalorder %s10, 1
    %p88 = por %p86, %p87
    %p89 = scmp.ne.s32.totalorder %s81, %s84
    %p90 = scmp.eq.s32.totalorder %s10, 0
    %p91 = por %p89, %p90
    %p92 = scmp.ne.s32.totalorder %s81, %s84
    %p93 = scmp.eq.s32.totalorder %s15, 1
    %p94 = por %p92, %p93
    %p95 = scmp.ne.s32.totalorder %s84, %s85
    %p96 = scmp.eq.s32.totalorder %s15, 0
    %p97 = por %p95, %p96
    %p98 = scmp.ne.s32.totalorder %s84, %s85
    %p99 = scmp.eq.s32.totalorder %s16, 1
    %p100 = por %p98, %p99
    %p102 = scmp.ne.s32.totalorder %s85, %s101
    %p103 = scmp.eq.s32.totalorder %s16, 0
    %p104 = por %p102, %p103
    %s105 = ssub.s32 %s17, %s29
    %p106 = scmp.eq.s32.totalorder %s105, 0
    %s108 = sadd.s32 %s107, 1
    %s109 = scalar_select %p106, %s107, %s108
    %p112 = pneg %p106
    %p113 = scmp.eq.s32.totalorder %s10, 1
    %p114 = por %p112, %p113
    %p115 = scmp.ne.s32.totalorder %s107, %s110
    %p116 = scmp.eq.s32.totalorder %s10, 0
    %p117 = por %p115, %p116
    %p118 = scmp.ne.s32.totalorder %s107, %s110
    %p119 = scmp.eq.s32.totalorder %s15, 1
    %p120 = por %p118, %p119
    %p121 = scmp.ne.s32.totalorder %s110, %s111
    %p122 = scmp.eq.s32.totalorder %s15, 0
    %p123 = por %p121, %p122
    %p124 = scmp.ne.s32.totalorder %s110, %s111
    %p125 = scmp.eq.s32.totalorder %s16, 1
    %p126 = por %p124, %p125
    %p128 = scmp.ne.s32.totalorder %s111, %s127
    %p129 = scmp.eq.s32.totalorder %s16, 0
    %p130 = por %p128, %p129
    %p131 = scmp.le.s32.totalorder 1, %s10
    %p132 = scmp.lt.s32.totalorder %s10, 3
    %p133 = pnand %p131, %p132
    %p134 = pneg %p133
    // Predicated region
    $region9: #{cbr_forward.2} parent=5 // pred_check
      _
    $region10: #{cbr_forward.2} parent=5 // pred_check_branch
      %136 = sbr.rel (%p133) target = $region12
    $region11: #{cbr_forward.2} parent=5 // pred_region
      %s137 = ssub.s32 %s10, 1
      // Predicated region
      $region13: #{cbr_forward.2} parent=11 // pred_check
        %p138 = pneg %p71
      $region14: #{cbr_forward.2} parent=11 // pred_check_branch
        %140 = sbr.rel (%p138) target = $region16
      $region15: #{cbr_forward.2} parent=11 // pred_region
        _
      $region16: #{cbr_forward.2} parent=11 // pred_fallthru
        _
    $region12: #{cbr_forward.2} parent=5 // pred_fallthru
      _
    %p141 = scmp.lt.s32.totalorder %s10, 2
    // Predicated region
    $region17: #{cbr_forward.2} parent=5 // pred_check
      %p142 = pneg %p141
    $region18: #{cbr_forward.2} parent=5 // pred_check_branch
      %144 = sbr.rel (%p142) target = $region20
    $region19: #{cbr_forward.2} parent=5 // pred_region
      // Predicated region
      $region21: #{cbr_forward.2} parent=19 // pred_check
        %p145 = pneg %p44
      $region22: #{cbr_forward.2} parent=19 // pred_check_branch
        %147 = sbr.rel (%p145) target = $region24
      $region23: #{cbr_forward.2} parent=19 // pred_region
        %s148 = sadd.s32 %s17, %s18
        %s149 = smul.u32 25, %s148
        %p150 = scmp.lt.s32.totalorder %s149, 49
        %s151 = scalar_select %p150, %s149, 49
        %s152 = smul.addr %s151, 4
        %s153 = scalar_lea.vmem %s0, %s152
        %s154 = sadd.s32 %s17, %s18
        %s155 = smul.u32 25, %s154
      $region24: #{cbr_forward.2} parent=19 // pred_fallthru
        _
    $region20: #{cbr_forward.2} parent=5 // pred_fallthru
      _
    %p156 = scmp.le.s32.totalorder 1, %s10
    %p157 = scmp.lt.s32.totalorder %s10, 3
    %p158 = pnand %p156, %p157
    %p159 = pneg %p158
    // Predicated region
    $region25: #{cbr_forward.2} parent=5 // pred_check
      _
    $region26: #{cbr_forward.2} parent=5 // pred_check_branch
      %161 = sbr.rel (%p158) target = $region28
    $region27: #{cbr_forward.2} parent=5 // pred_region
      %s162 = ssub.s32 %s10, 1
      %s163 = sadd.s32 %s19, %s20
      %s164 = smul.u32 25, %s163
      %p165 = scmp.lt.s32.totalorder %s164, 49
      %s166 = scalar_select %p165, %s164, 49
      %s167 = smul.addr %s166, 4
      %s168 = scalar_lea.vmem %s0, %s167
      %p169 = pneg %p50
      %p170 = pneg %p47
      %p171 = pneg %p71
      %p172 = pneg %p68
      %p173 = pneg %p97
      %p174 = pneg %p94
      %p175 = scmp.lt.s32.totalorder %s19, 1
      %s176 = scalar_select %p175, %s19, 1
      %s177 = scalar_lea.vmem %s2, %s176
      %p178 = pneg %p123
      %p179 = pneg %p120
      %p180 = scmp.lt.s32.totalorder %s19, 1
      %s181 = scalar_select %p180, %s19, 1
      %s182 = scalar_lea.vmem %s3, %s181
      %s183 = sadd.s32 %s19, %s20
      %s184 = smul.u32 25, %s183
      %p185 = scmp.lt.s32.totalorder %s184, 49
      %s186 = scalar_select %p185, %s184, 49
      %s187 = smul.addr %s186, 4
      %s188 = scalar_lea.vmem %s0, %s187
      %s189 = sadd.s32 %s19, %s20
      %s190 = smul.u32 25, %s189
      %p191 = scmp.lt.s32.totalorder %s19, 1
      %s192 = scalar_select %p191, %s19, 1
      %s193 = scalar_lea.vmem %s2, %s192
      %p194 = scmp.lt.s32.totalorder %s19, 1
      %s195 = scalar_select %p194, %s19, 1
      %s196 = scalar_lea.vmem %s3, %s195
      %p198 = scmp.eq.s32.totalorder %s20, 0
      // Predicated region
      $region29: #{cbr_forward.2} parent=27 // pred_check
        %p199 = pneg %p198
      $region30: #{cbr_forward.2} parent=27 // pred_check_branch
        %201 = sbr.rel (%p199) target = $region32
      $region31: #{cbr_forward.2} parent=27 // pred_region
        %202 = vst [vmem:[%s193] sm:$0x1] 0.0
        %203 = vst [vmem:[%s196] sm:$0x1] 0.0
      $region32: #{cbr_forward.2} parent=27 // pred_fallthru
        _
      %v204 = vld [vmem:[%s188] sm:$0xf]
      %v205 = vld [vmem:[%s188 + $0x4] sm:$0xf]
      %v206 = vld [vmem:[%s188 + $0x8] sm:$0xf]
      %v207 = vld [vmem:[%s188 + $0xc] sm:$0xf]
      %v208 = vld [vmem:[%s188 + $0x10] sm:$0xf]
      %v209 = vld [vmem:[%s188 + $0x14] sm:$0xf]
      %v210 = vld [vmem:[%s188 + $0x18] sm:$0xf]
      %v211 = vld [vmem:[%s188 + $0x1c] sm:$0xf]
      %v212 = vld [vmem:[%s188 + $0x20] sm:$0xf]
      %v213 = vld [vmem:[%s188 + $0x24] sm:$0xf]
      %v214 = vld [vmem:[%s188 + $0x28] sm:$0xf]
      %v215 = vld [vmem:[%s188 + $0x2c] sm:$0xf]
      %v216 = vld [vmem:[%s188 + $0x30] sm:$0xf]
      %v217 = vld [vmem:[%s188 + $0x34] sm:$0xf]
      %v218 = vld [vmem:[%s188 + $0x38] sm:$0xf]
      %v219 = vld [vmem:[%s188 + $0x3c] sm:$0xf]
      %v220 = vld [vmem:[%s188 + $0x40] sm:$0xf]
      %v221 = vld [vmem:[%s188 + $0x44] sm:$0xf]
      %v222 = vld [vmem:[%s188 + $0x48] sm:$0xf]
      %v223 = vld [vmem:[%s188 + $0x4c] sm:$0xf]
      %v224 = vld [vmem:[%s188 + $0x50] sm:$0xf]
      %v225 = vld [vmem:[%s188 + $0x54] sm:$0xf]
      %v226 = vld [vmem:[%s188 + $0x58] sm:$0xf]
      %v227 = vld [vmem:[%s188 + $0x5c] sm:$0xf]
      %v228 = vld [vmem:[%s188 + $0x60] sm:$0xf]
      %v229 = vld [vmem:[%s1] sm:$0xf]
      %v230 = vld [vmem:[%s1 + $0x4] sm:$0xf]
      %v231 = vld [vmem:[%s1 + $0x8] sm:$0xf]
      %v232 = vld [vmem:[%s1 + $0xc] sm:$0xf]
      %v233 = vld [vmem:[%s1 + $0x10] sm:$0x3]
      %v259 = vunpack.c.l.b16 %v204
      %v260 = vunpack.c.l.b16 %v205
      %v261 = vunpack.c.l.b16 %v206
      %v262 = vunpack.c.l.b16 %v207
      %v263 = vunpack.c.l.b16 %v208
      %v264 = vunpack.c.l.b16 %v209
      %v265 = vunpack.c.l.b16 %v210
      %v266 = vunpack.c.l.b16 %v211
      %v267 = vunpack.c.l.b16 %v212
      %v268 = vunpack.c.l.b16 %v213
      %v269 = vunpack.c.l.b16 %v214
      %v270 = vunpack.c.l.b16 %v215
      %v271 = vunpack.c.l.b16 %v216
      %v272 = vunpack.c.l.b16 %v217
      %v273 = vunpack.c.l.b16 %v218
      %v274 = vunpack.c.l.b16 %v219
      %v275 = vunpack.c.l.b16 %v220
      %v276 = vunpack.c.l.b16 %v221
      %v277 = vunpack.c.l.b16 %v222
      %v278 = vunpack.c.l.b16 %v223
      %v279 = vunpack.c.l.b16 %v224
      %v280 = vunpack.c.l.b16 %v225
      %v281 = vunpack.c.l.b16 %v226
      %v282 = vunpack.c.l.b16 %v227
      %v283 = vunpack.c.l.b16 %v228
      %v284 = vpack.c.b16 %v260, %v259
      %v285 = vpack.c.b16 %v262, %v261
      %v286 = vpack.c.b16 %v264, %v263
      %v287 = vpack.c.b16 %v266, %v265
      %v288 = vpack.c.b16 %v268, %v267
      %v289 = vpack.c.b16 %v270, %v269
      %v290 = vpack.c.b16 %v272, %v271
      %v291 = vpack.c.b16 %v274, %v273
      %v292 = vpack.c.b16 %v276, %v275
      %v293 = vpack.c.b16 %v278, %v277
      %v294 = vpack.c.b16 %v280, %v279
      %v295 = vpack.c.b16 %v282, %v281
      %v296 = vpack.c.b16 %v283, %v283
      %v302 = vunpack.c.l.b16 %v229
      %v303 = vunpack.c.l.b16 %v230
      %v304 = vunpack.c.l.b16 %v231
      %v305 = vunpack.c.l.b16 %v232
      %v306 = vunpack.c.l.b16 %v233
      %v307 = vpack.c.b16 %v303, %v302
      %v308 = vpack.c.b16 %v305, %v304
      %v309 = vpack.c.b16 %v306, %v306
      %vm312 = vcmask 293888
      %v314 = vsel %vm312, %v284, 0
      %v317 = vsel %vm312, %v285, 0
      %v320 = vsel %vm312, %v286, 0
      %v323 = vsel %vm312, %v287, 0
      %v326 = vsel %vm312, %v288, 0
      %v329 = vsel %vm312, %v289, 0
      %v332 = vsel %vm312, %v290, 0
      %v335 = vsel %vm312, %v291, 0
      %v338 = vsel %vm312, %v292, 0
      %v341 = vsel %vm312, %v293, 0
      %v344 = vsel %vm312, %v294, 0
      %v347 = vsel %vm312, %v295, 0
      %v350 = vsel %vm312, %v296, 0
      %vm352 = vcmask 1041408
      %v354 = vsel %vm352, %v309, 0
      %356 = vmatpush.bf16.msra.mxu0 0
      %357 = vmatpush.bf16.msra.mxu0 0
      %358 = vmatpush.bf16.msra.mxu0 0
      %359 = vmatpush.bf16.msra.mxu0 0
      %360 = vmatpush.bf16.msra.mxu0 0
      %361 = vmatpush.bf16.msra.mxu0 %v354
      %362 = vmatpush.bf16.msra.mxu0 %v308
      %363 = vmatpush.bf16.msra.mxu0 %v307
      %364 = vmatmul.bf16.gmra.mxu0 %v314
      %v365 = vpop.f32.mrf.mxu0
      %v366 = vadd.f32 0.0, %v365
      %v367 = vpop.f32.mrf.mxu0
      %v368 = vadd.f32 0.0, %v367
      %369 = vmatmul.bf16.gmra.mxu0 %v317
      %v370 = vpop.f32.mrf.mxu0
      %v371 = vadd.f32 0.0, %v370
      %v372 = vpop.f32.mrf.mxu0
      %v373 = vadd.f32 0.0, %v372
      %374 = vmatmul.bf16.gmra.mxu0 %v320
      %v375 = vpop.f32.mrf.mxu0
      %v376 = vadd.f32 0.0, %v375
      %v377 = vpop.f32.mrf.mxu0
      %v378 = vadd.f32 0.0, %v377
      %379 = vmatmul.bf16.gmra.mxu0 %v323
      %v380 = vpop.f32.mrf.mxu0
      %v381 = vadd.f32 0.0, %v380
      %v382 = vpop.f32.mrf.mxu0
      %v383 = vadd.f32 0.0, %v382
      %384 = vmatmul.bf16.gmra.mxu0 %v326
      %v385 = vpop.f32.mrf.mxu0
      %v386 = vadd.f32 0.0, %v385
      %v387 = vpop.f32.mrf.mxu0
      %v388 = vadd.f32 0.0, %v387
      %389 = vmatmul.bf16.gmra.mxu0 %v329
      %v390 = vpop.f32.mrf.mxu0
      %v391 = vadd.f32 0.0, %v390
      %v392 = vpop.f32.mrf.mxu0
      %v393 = vadd.f32 0.0, %v392
      %394 = vmatmul.bf16.gmra.mxu0 %v332
      %v395 = vpop.f32.mrf.mxu0
      %v396 = vadd.f32 0.0, %v395
      %v397 = vpop.f32.mrf.mxu0
      %v398 = vadd.f32 0.0, %v397
      %399 = vmatmul.bf16.gmra.mxu0 %v335
      %v400 = vpop.f32.mrf.mxu0
      %v401 = vadd.f32 0.0, %v400
      %v402 = vpop.f32.mrf.mxu0
      %v403 = vadd.f32 0.0, %v402
      %404 = vmatmul.bf16.gmra.mxu0 %v338
      %v405 = vpop.f32.mrf.mxu0
      %v406 = vadd.f32 0.0, %v405
      %v407 = vpop.f32.mrf.mxu0
      %v408 = vadd.f32 0.0, %v407
      %409 = vmatmul.bf16.gmra.mxu0 %v341
      %v410 = vpop.f32.mrf.mxu0
      %v411 = vadd.f32 0.0, %v410
      %v412 = vpop.f32.mrf.mxu0
      %v413 = vadd.f32 0.0, %v412
      %414 = vmatmul.bf16.gmra.mxu0 %v344
      %v415 = vpop.f32.mrf.mxu0
      %v416 = vadd.f32 0.0, %v415
      %v417 = vpop.f32.mrf.mxu0
      %v418 = vadd.f32 0.0, %v417
      %419 = vmatmul.bf16.gmra.mxu0 %v347
      %v420 = vpop.f32.mrf.mxu0
      %v421 = vadd.f32 0.0, %v420
      %v422 = vpop.f32.mrf.mxu0
      %v423 = vadd.f32 0.0, %v422
      %424 = vmatmul.bf16.gmra.mxu0 %v350
      %v425 = vpop.f32.mrf.mxu0
      %v426 = vadd.f32 0.0, %v425
      %v427 = vpop.f32.mrf.mxu0
      %428 = vdwg.mxu0
      %v429 = vld [vmem:[%s193] sm:$0x1]
      %v430 = vadd.f32 %v366, %v368
      %v431 = vadd.f32 %v430, %v371
      %v432 = vadd.f32 %v431, %v373
      %v433 = vadd.f32 %v432, %v376
      %v434 = vadd.f32 %v433, %v378
      %v435 = vadd.f32 %v434, %v381
      %v436 = vadd.f32 %v435, %v383
      %v437 = vadd.f32 %v436, %v386
      %v438 = vadd.f32 %v437, %v388
      %v439 = vadd.f32 %v438, %v391
      %v440 = vadd.f32 %v439, %v393
      %v441 = vadd.f32 %v440, %v396
      %v442 = vadd.f32 %v441, %v398
      %v443 = vadd.f32 %v442, %v401
      %v444 = vadd.f32 %v443, %v403
      %v445 = vadd.f32 %v444, %v406
      %v446 = vadd.f32 %v445, %v408
      %v447 = vadd.f32 %v446, %v411
      %v448 = vadd.f32 %v447, %v413
      %v449 = vadd.f32 %v448, %v416
      %v450 = vadd.f32 %v449, %v418
      %v451 = vadd.f32 %v450, %v421
      %v452 = vadd.f32 %v451, %v423
      %v453 = vadd.f32 %v452, %v426
      %v454 = vrot.slane %v453, 4
      %v455 = vadd.f32 %v453, %v454
      %v456 = vrot.slane %v455, 2
      %v457 = vadd.f32 %v455, %v456
      %v458 = vrot.slane %v457, 1
      %v459 = vadd.f32 %v457, %v458
      %v460 = vadd.f32 %v429, %v459
      %461 = vst [vmem:[%s193] sm:$0x1] %v460
      %v462 = vld [vmem:[%s196] sm:$0x1]
      %v463 = vmul.f32 %v366, %v366
      %v464 = vmul.f32 %v368, %v368
      %v465 = vmul.f32 %v371, %v371
      %v466 = vmul.f32 %v373, %v373
      %v467 = vmul.f32 %v376, %v376
      %v468 = vmul.f32 %v378, %v378
      %v469 = vmul.f32 %v381, %v381
      %v470 = vmul.f32 %v383, %v383
      %v471 = vmul.f32 %v386, %v386
      %v472 = vmul.f32 %v388, %v388
      %v473 = vmul.f32 %v391, %v391
      %v474 = vmul.f32 %v393, %v393
      %v475 = vmul.f32 %v396, %v396
      %v476 = vmul.f32 %v398, %v398
      %v477 = vmul.f32 %v401, %v401
      %v478 = vmul.f32 %v403, %v403
      %v479 = vmul.f32 %v406, %v406
      %v480 = vmul.f32 %v408, %v408
      %v481 = vmul.f32 %v411, %v411
      %v482 = vmul.f32 %v413, %v413
      %v483 = vmul.f32 %v416, %v416
      %v484 = vmul.f32 %v418, %v418
      %v485 = vmul.f32 %v421, %v421
      %v486 = vmul.f32 %v423, %v423
      %v487 = vmul.f32 %v426, %v426
      %v488 = vadd.f32 %v463, %v464
      %v489 = vadd.f32 %v488, %v465
      %v490 = vadd.f32 %v489, %v466
      %v491 = vadd.f32 %v490, %v467
      %v492 = vadd.f32 %v491, %v468
      %v493 = vadd.f32 %v492, %v469
      %v494 = vadd.f32 %v493, %v470
      %v495 = vadd.f32 %v494, %v471
      %v496 = vadd.f32 %v495, %v472
      %v497 = vadd.f32 %v496, %v473
      %v498 = vadd.f32 %v497, %v474
      %v499 = vadd.f32 %v498, %v475
      %v500 = vadd.f32 %v499, %v476
      %v501 = vadd.f32 %v500, %v477
      %v502 = vadd.f32 %v501, %v478
      %v503 = vadd.f32 %v502, %v479
      %v504 = vadd.f32 %v503, %v480
      %v505 = vadd.f32 %v504, %v481
      %v506 = vadd.f32 %v505, %v482
      %v507 = vadd.f32 %v506, %v483
      %v508 = vadd.f32 %v507, %v484
      %v509 = vadd.f32 %v508, %v485
      %v510 = vadd.f32 %v509, %v486
      %v511 = vadd.f32 %v510, %v487
      %v512 = vrot.slane %v511, 4
      %v513 = vadd.f32 %v511, %v512
      %v514 = vrot.slane %v513, 2
      %v515 = vadd.f32 %v513, %v514
      %v516 = vrot.slane %v515, 1
      %v517 = vadd.f32 %v515, %v516
      %v518 = vadd.f32 %v462, %v517
      %519 = vst [vmem:[%s196] sm:$0x1] %v518
      %p520 = scmp.lt.s32.totalorder %s19, 1
      %s521 = scalar_select %p520, %s19, 1
      %s522 = scalar_lea.vmem %s2, %s521
      %p523 = scmp.lt.s32.totalorder %s19, 1
      %s524 = scalar_select %p523, %s19, 1
      %s525 = scalar_lea.vmem %s3, %s524
      // Predicated region
      $region33: #{cbr_forward.2} parent=27 // pred_check
        %p526 = pneg %p94
      $region34: #{cbr_forward.2} parent=27 // pred_check_branch
        %528 = sbr.rel (%p526) target = $region36
      $region35: #{cbr_forward.2} parent=27 // pred_region
        _
      $region36: #{cbr_forward.2} parent=27 // pred_fallthru
        _
      // Predicated region
      $region37: #{cbr_forward.2} parent=27 // pred_check
        %p529 = pneg %p120
      $region38: #{cbr_forward.2} parent=27 // pred_check_branch
        %531 = sbr.rel (%p529) target = $region40
      $region39: #{cbr_forward.2} parent=27 // pred_region
        _
      $region40: #{cbr_forward.2} parent=27 // pred_fallthru
        _
    $region28: #{cbr_forward.2} parent=5 // pred_fallthru
      _
    %p532 = scmp.le.s32.totalorder 2, %s10
    // Predicated region
    $region41: #{cbr_forward.2} parent=5 // pred_check
      %p533 = pneg %p532
    $region42: #{cbr_forward.2} parent=5 // pred_check_branch
      %535 = sbr.rel (%p533) target = $region44
    $region43: #{cbr_forward.2} parent=5 // pred_region
      %s536 = ssub.s32 %s10, 2
      // Predicated region
      $region45: #{cbr_forward.2} parent=43 // pred_check
        %p537 = pneg %p100
      $region46: #{cbr_forward.2} parent=43 // pred_check_branch
        %539 = sbr.rel (%p537) target = $region48
      $region47: #{cbr_forward.2} parent=43 // pred_region
        %p540 = scmp.lt.s32.totalorder %s21, 1
        %s541 = scalar_select %p540, %s21, 1
        %s542 = scalar_lea.vmem %s2, %s541
      $region48: #{cbr_forward.2} parent=43 // pred_fallthru
        _
      // Predicated region
      $region49: #{cbr_forward.2} parent=43 // pred_check
        %p543 = pneg %p126
      $region50: #{cbr_forward.2} parent=43 // pred_check_branch
        %545 = sbr.rel (%p543) target = $region52
      $region51: #{cbr_forward.2} parent=43 // pred_region
        %p546 = scmp.lt.s32.totalorder %s21, 1
        %s547 = scalar_select %p546, %s21, 1
        %s548 = scalar_lea.vmem %s3, %s547
      $region52: #{cbr_forward.2} parent=43 // pred_fallthru
        _
    $region44: #{cbr_forward.2} parent=5 // pred_fallthru
      _
  $region6: #{cbr_forward.2} parent=0 // loop_footer
    %s14 = sadd.s32 1, %s10
  $region7: #{cbr_forward.2} parent=0 // loop_footer_branch
    %9 = sbr.rel target = $region3
  $region8: #{cbr_forward.2} parent=0 // loop_exit
    _

// kernel: cbr_forward.3
$region0: #{cbr_forward.3}
  #allocation0 [shape = 'u32[]', space=smem, size = 0x4, offset = 0x4, fixed_abs, tag = 'smem constant byte address 0x4 - core index']
  #allocation1 [shape = 'u32[72,128]{1,0:T(1,128)}', space=vmem, size = 0x9000, scoped, tag = 'internal scratch']
  %s0 = inlined_call_operand.vmem [shape: bf16[400,36], index: 0, kind: input, shape index: {}]
  %s1 = inlined_call_operand.vmem [shape: bf16[36,128], index: 1, kind: input, shape index: {}]
  %s2 = inlined_call_operand.vmem [shape: f32[2,1,128], index: 2, kind: input, shape index: {}]
  %s3 = inlined_call_operand.vmem [shape: f32[2,1,128], index: 3, kind: input, shape index: {}]
  %s4 = inlined_call_operand.vmem [shape: f32[1,128], index: 4, kind: input, shape index: {}]
  %s5 = inlined_call_operand.vmem [shape: f32[1,128], index: 5, kind: input, shape index: {}]
  %s6 = inlined_call_operand.vmem [shape: f32[400,128], index: 6, kind: output, shape index: {}]
  %s7 = sld [smem:[#allocation0]]
  $region57: #{cbr_forward.3} parent=0
    _
  %s9 = ssub.s32 1, %s7
  %s10 = scalar_select 0, %s9, %s7
  loop: start=0, step=1, limit=4
  $region2: #{cbr_forward.3} parent=0 // loop_pre_header
    _
  $region3: #{cbr_forward.3} parent=0 // loop_header
    %s12 = sphi 0, %s16
    %p13 = scmp.ge.s32.totalorder %s12, 4
    %s22 = sphi 0, %s24
    %s25 = sphi 0, %s22
    %s26 = sphi 0, %s25
    %s42 = sphi 0, %s26
    %s46 = sphi 0, %s46
    %s48 = sphi 0, %s46
    %s49 = sphi 0, %s48
    %s63 = sphi 0, %s49
    %s67 = sphi 0, %s67
    %s69 = sphi 0, %s67
    %s70 = sphi 0, %s69
    %s84 = sphi 0, %s70
    %s88 = sphi 0, %s88
    %s90 = sphi 0, %s88
    %s91 = sphi 0, %s90
    %s105 = sphi 0, %s91
    %s109 = sphi 0, %s109
    %s111 = sphi 0, %s109
    %s112 = sphi 0, %s111
    %s126 = sphi 0, %s112
    %s130 = sphi 0, %s130
    %s132 = sphi 0, %s130
    %s133 = sphi 0, %s132
    %s147 = sphi 0, %s133
    %s153 = sphi 0, %s155
    %s156 = sphi 0, %s153
    %s157 = sphi 0, %s156
    %s173 = sphi 0, %s157
  $region4: #{cbr_forward.3} parent=0 // loop_header_branch
    %15 = sbr.rel (%p13) target = $region8
  $region5: #{cbr_forward.3} parent=0 // loop_body
    %s17 = ssub.s32 %s12, 1
    %s18 = ssub.s32 %s12, 2
    %s19 = sadd.s32 %s12, 1
    %s20 = ssub.s32 %s12, %s19
    %p21 = scmp.eq.s32.totalorder %s20, 0
    %s23 = sadd.s32 %s22, 1
    %s24 = scalar_select %p21, %s22, %s23
    %p27 = pneg %p21
    %p28 = scmp.eq.s32.totalorder %s12, 1
    %p29 = por %p27, %p28
    %p30 = scmp.ne.s32.totalorder %s22, %s25
    %p31 = scmp.eq.s32.totalorder %s12, 0
    %p32 = por %p30, %p31
    %p33 = scmp.ne.s32.totalorder %s22, %s25
    %p34 = scmp.eq.s32.totalorder %s17, 1
    %p35 = por %p33, %p34
    %p36 = scmp.ne.s32.totalorder %s25, %s26
    %p37 = scmp.eq.s32.totalorder %s17, 0
    %p38 = por %p36, %p37
    %p39 = scmp.ne.s32.totalorder %s25, %s26
    %p40 = scmp.eq.s32.totalorder %s18, 1
    %p41 = por %p39, %p40
    %p43 = scmp.ne.s32.totalorder %s26, %s42
    %p44 = scmp.eq.s32.totalorder %s18, 0
    %p45 = por %p43, %p44
    %s47 = sadd.s32 %s46, 1
    %p50 = scmp.eq.s32.totalorder %s12, 1
    %p51 = scmp.ne.s32.totalorder %s46, %s48
    %p52 = scmp.eq.s32.totalorder %s12, 0
    %p53 = por %p51, %p52
    %p54 = scmp.ne.s32.totalorder %s46, %s48
    %p55 = scmp.eq.s32.totalorder %s17, 1
    %p56 = por %p54, %p55
    %p57 = scmp.ne.s32.totalorder %s48, %s49
    %p58 = scmp.eq.s32.totalorder %s17, 0
    %p59 = por %p57, %p58
    %p60 = scmp.ne.s32.totalorder %s48, %s49
    %p61 = scmp.eq.s32.totalorder %s18, 1
    %p62 = por %p60, %p61
    %p64 = scmp.ne.s32.totalorder %s49, %s63
    %p65 = scmp.eq.s32.totalorder %s18, 0
    %p66 = por %p64, %p65
    %s68 = sadd.s32 %s67, 1
    %p71 = scmp.eq.s32.totalorder %s12, 1
    %p72 = scmp.ne.s32.totalorder %s67, %s69
    %p73 = scmp.eq.s32.totalorder %s12, 0
    %p74 = por %p72, %p73
    %p75 = scmp.ne.s32.totalorder %s67, %s69
    %p76 = scmp.eq.s32.totalorder %s17, 1
    %p77 = por %p75, %p76
    %p78 = scmp.ne.s32.totalorder %s69, %s70
    %p79 = scmp.eq.s32.totalorder %s17, 0
    %p80 = por %p78, %p79
    %p81 = scmp.ne.s32.totalorder %s69, %s70
    %p82 = scmp.eq.s32.totalorder %s18, 1
    %p83 = por %p81, %p82
    %p85 = scmp.ne.s32.totalorder %s70, %s84
    %p86 = scmp.eq.s32.totalorder %s18, 0
    %p87 = por %p85, %p86
    %s89 = sadd.s32 %s88, 1
    %p92 = scmp.eq.s32.totalorder %s12, 1
    %p93 = scmp.ne.s32.totalorder %s88, %s90
    %p94 = scmp.eq.s32.totalorder %s12, 0
    %p95 = por %p93, %p94
    %p96 = scmp.ne.s32.totalorder %s88, %s90
    %p97 = scmp.eq.s32.totalorder %s17, 1
    %p98 = por %p96, %p97
    %p99 = scmp.ne.s32.totalorder %s90, %s91
    %p100 = scmp.eq.s32.totalorder %s17, 0
    %p101 = por %p99, %p100
    %p102 = scmp.ne.s32.totalorder %s90, %s91
    %p103 = scmp.eq.s32.totalorder %s18, 1
    %p104 = por %p102, %p103
    %p106 = scmp.ne.s32.totalorder %s91, %s105
    %p107 = scmp.eq.s32.totalorder %s18, 0
    %p108 = por %p106, %p107
    %s110 = sadd.s32 %s109, 1
    %p113 = scmp.eq.s32.totalorder %s12, 1
    %p114 = scmp.ne.s32.totalorder %s109, %s111
    %p115 = scmp.eq.s32.totalorder %s12, 0
    %p116 = por %p114, %p115
    %p117 = scmp.ne.s32.totalorder %s109, %s111
    %p118 = scmp.eq.s32.totalorder %s17, 1
    %p119 = por %p117, %p118
    %p120 = scmp.ne.s32.totalorder %s111, %s112
    %p121 = scmp.eq.s32.totalorder %s17, 0
    %p122 = por %p120, %p121
    %p123 = scmp.ne.s32.totalorder %s111, %s112
    %p124 = scmp.eq.s32.totalorder %s18, 1
    %p125 = por %p123, %p124
    %p127 = scmp.ne.s32.totalorder %s112, %s126
    %p128 = scmp.eq.s32.totalorder %s18, 0
    %p129 = por %p127, %p128
    %s131 = sadd.s32 %s130, 1
    %p134 = scmp.eq.s32.totalorder %s12, 1
    %p135 = scmp.ne.s32.totalorder %s130, %s132
    %p136 = scmp.eq.s32.totalorder %s12, 0
    %p137 = por %p135, %p136
    %p138 = scmp.ne.s32.totalorder %s130, %s132
    %p139 = scmp.eq.s32.totalorder %s17, 1
    %p140 = por %p138, %p139
    %p141 = scmp.ne.s32.totalorder %s132, %s133
    %p142 = scmp.eq.s32.totalorder %s17, 0
    %p143 = por %p141, %p142
    %p144 = scmp.ne.s32.totalorder %s132, %s133
    %p145 = scmp.eq.s32.totalorder %s18, 1
    %p146 = por %p144, %p145
    %p148 = scmp.ne.s32.totalorder %s133, %s147
    %p149 = scmp.eq.s32.totalorder %s18, 0
    %p150 = por %p148, %p149
    %s151 = ssub.s32 %s12, %s19
    %p152 = scmp.eq.s32.totalorder %s151, 0
    %s154 = sadd.s32 %s153, 1
    %s155 = scalar_select %p152, %s153, %s154
    %p158 = pneg %p152
    %p159 = scmp.eq.s32.totalorder %s12, 1
    %p160 = por %p158, %p159
    %p161 = scmp.ne.s32.totalorder %s153, %s156
    %p162 = scmp.eq.s32.totalorder %s12, 0
    %p163 = por %p161, %p162
    %p164 = scmp.ne.s32.totalorder %s153, %s156
    %p165 = scmp.eq.s32.totalorder %s17, 1
    %p166 = por %p164, %p165
    %p167 = scmp.ne.s32.totalorder %s156, %s157
    %p168 = scmp.eq.s32.totalorder %s17, 0
    %p169 = por %p167, %p168
    %p170 = scmp.ne.s32.totalorder %s156, %s157
    %p171 = scmp.eq.s32.totalorder %s18, 1
    %p172 = por %p170, %p171
    %p174 = scmp.ne.s32.totalorder %s157, %s173
    %p175 = scmp.eq.s32.totalorder %s18, 0
    %p176 = por %p174, %p175
    %p177 = scmp.le.s32.totalorder 1, %s12
    %p178 = scmp.lt.s32.totalorder %s12, 3
    %p179 = pnand %p177, %p178
    %p180 = pneg %p179
    // Predicated region
    $region9: #{cbr_forward.3} parent=5 // pred_check
      _
    $region10: #{cbr_forward.3} parent=5 // pred_check_branch
      %182 = sbr.rel (%p179) target = $region12
    $region11: #{cbr_forward.3} parent=5 // pred_region
      %s183 = ssub.s32 %s12, 1
      // Predicated region
      $region13: #{cbr_forward.3} parent=11 // pred_check
        %p184 = pneg %p59
      $region14: #{cbr_forward.3} parent=11 // pred_check_branch
        %186 = sbr.rel (%p184) target = $region16
      $region15: #{cbr_forward.3} parent=11 // pred_region
        _
      $region16: #{cbr_forward.3} parent=11 // pred_fallthru
        _
      // Predicated region
      $region17: #{cbr_forward.3} parent=11 // pred_check
        %p187 = pneg %p80
      $region18: #{cbr_forward.3} parent=11 // pred_check_branch
        %189 = sbr.rel (%p187) target = $region20
      $region19: #{cbr_forward.3} parent=11 // pred_region
        _
      $region20: #{cbr_forward.3} parent=11 // pred_fallthru
        _
      // Predicated region
      $region21: #{cbr_forward.3} parent=11 // pred_check
        %p190 = pneg %p101
      $region22: #{cbr_forward.3} parent=11 // pred_check_branch
        %192 = sbr.rel (%p190) target = $region24
      $region23: #{cbr_forward.3} parent=11 // pred_region
        _
      $region24: #{cbr_forward.3} parent=11 // pred_fallthru
        _
      // Predicated region
      $region25: #{cbr_forward.3} parent=11 // pred_check
        %p193 = pneg %p122
      $region26: #{cbr_forward.3} parent=11 // pred_check_branch
        %195 = sbr.rel (%p193) target = $region28
      $region27: #{cbr_forward.3} parent=11 // pred_region
        _
      $region28: #{cbr_forward.3} parent=11 // pred_fallthru
        _
      // Predicated region
      $region29: #{cbr_forward.3} parent=11 // pred_check
        %p196 = pneg %p143
      $region30: #{cbr_forward.3} parent=11 // pred_check_branch
        %198 = sbr.rel (%p196) target = $region32
      $region31: #{cbr_forward.3} parent=11 // pred_region
        _
      $region32: #{cbr_forward.3} parent=11 // pred_fallthru
        _
    $region12: #{cbr_forward.3} parent=5 // pred_fallthru
      _
    %p199 = scmp.lt.s32.totalorder %s12, 2
    // Predicated region
    $region33: #{cbr_forward.3} parent=5 // pred_check
      %p200 = pneg %p199
    $region34: #{cbr_forward.3} parent=5 // pred_check_branch
      %202 = sbr.rel (%p200) target = $region36
    $region35: #{cbr_forward.3} parent=5 // pred_region
      // Predicated region
      $region37: #{cbr_forward.3} parent=35 // pred_check
        %p203 = pneg %p32
      $region38: #{cbr_forward.3} parent=35 // pred_check_branch
        %205 = sbr.rel (%p203) target = $region40
      $region39: #{cbr_forward.3} parent=35 // pred_region
        %s206 = smul.u32 25, %s12
        %p207 = scmp.lt.s32.totalorder %s206, 49
        %s208 = scalar_select %p207, %s206, 49
        %s209 = smul.addr %s208, 4
        %s210 = scalar_lea.vmem %s0, %s209
        %s211 = smul.u32 25, %s12
      $region40: #{cbr_forward.3} parent=35 // pred_fallthru
        _
    $region36: #{cbr_forward.3} parent=5 // pred_fallthru
      _
    %p212 = scmp.le.s32.totalorder 1, %s12
    %p213 = scmp.lt.s32.totalorder %s12, 3
    %p214 = pnand %p212, %p213
    %p215 = pneg %p214
    // Predicated region
    $region41: #{cbr_forward.3} parent=5 // pred_check
      _
    $region42: #{cbr_forward.3} parent=5 // pred_check_branch
      %217 = sbr.rel (%p214) target = $region44
    $region43: #{cbr_forward.3} parent=5 // pred_region
      %s218 = ssub.s32 %s12, 1
      %s219 = smul.u32 25, %s17
      %p220 = scmp.lt.s32.totalorder %s219, 49
      %s221 = scalar_select %p220, %s219, 49
      %s222 = smul.addr %s221, 4
      %s223 = scalar_lea.vmem %s0, %s222
      %p224 = pneg %p38
      %p225 = pneg %p35
      %p226 = pneg %p59
      %p227 = pneg %p56
      %p228 = pneg %p80
      %p229 = pneg %p77
      %p230 = pneg %p101
      %p231 = pneg %p98
      %p232 = pneg %p122
      %p233 = pneg %p119
      %p234 = pneg %p143
      %p235 = pneg %p140
      %p236 = pneg %p169
      %p237 = pneg %p166
      %s238 = smul.u32 25, %s17
      %p239 = scmp.lt.s32.totalorder %s238, 49
      %s240 = scalar_select %p239, %s238, 49
      %s241 = smul.addr %s240, 8
      %s242 = scalar_lea.vmem %s6, %s241
      %s243 = smul.u32 25, %s17
      %p244 = scmp.lt.s32.totalorder %s243, 49
      %s245 = scalar_select %p244, %s243, 49
      %s246 = smul.addr %s245, 4
      %s247 = scalar_lea.vmem %s0, %s246
      %s248 = smul.u32 25, %s17
      %s249 = smul.u32 25, %s17
      %p250 = scmp.lt.s32.totalorder %s249, 49
      %s251 = scalar_select %p250, %s249, 49
      %s252 = smul.addr %s251, 8
      %s253 = scalar_lea.vmem %s6, %s252
      %s254 = smul.u32 25, %s17
      %v256 = vld [vmem:[%s247] sm:$0xf]
      %v257 = vld [vmem:[%s247 + $0x4] sm:$0xf]
      %v258 = vld [vmem:[%s247 + $0x8] sm:$0xf]
      %v259 = vld [vmem:[%s247 + $0xc] sm:$0xf]
      %v260 = vld [vmem:[%s247 + $0x10] sm:$0xf]
      %v261 = vld [vmem:[%s247 + $0x14] sm:$0xf]
      %v262 = vld [vmem:[%s247 + $0x18] sm:$0xf]
      %v263 = vld [vmem:[%s247 + $0x1c] sm:$0xf]
      %v264 = vld [vmem:[%s247 + $0x20] sm:$0xf]
      %v265 = vld [vmem:[%s247 + $0x24] sm:$0xf]
      %v266 = vld [vmem:[%s247 + $0x28] sm:$0xf]
      %v267 = vld [vmem:[%s247 + $0x2c] sm:$0xf]
      %v268 = vld [vmem:[%s247 + $0x30] sm:$0xf]
      %v269 = vld [vmem:[%s247 + $0x34] sm:$0xf]
      %v270 = vld [vmem:[%s247 + $0x38] sm:$0xf]
      %v271 = vld [vmem:[%s247 + $0x3c] sm:$0xf]
      %v272 = vld [vmem:[%s247 + $0x40] sm:$0xf]
      %v273 = vld [vmem:[%s247 + $0x44] sm:$0xf]
      %v274 = vld [vmem:[%s247 + $0x48] sm:$0xf]
      %v275 = vld [vmem:[%s247 + $0x4c] sm:$0xf]
      %v276 = vld [vmem:[%s247 + $0x50] sm:$0xf]
      %v277 = vld [vmem:[%s247 + $0x54] sm:$0xf]
      %v278 = vld [vmem:[%s247 + $0x58] sm:$0xf]
      %v279 = vld [vmem:[%s247 + $0x5c] sm:$0xf]
      %v280 = vld [vmem:[%s247 + $0x60] sm:$0xf]
      %v281 = vld [vmem:[%s1] sm:$0xf]
      %v282 = vld [vmem:[%s1 + $0x4] sm:$0xf]
      %v283 = vld [vmem:[%s1 + $0x8] sm:$0xf]
      %v284 = vld [vmem:[%s1 + $0xc] sm:$0xf]
      %v285 = vld [vmem:[%s1 + $0x10] sm:$0x3]
      %v311 = vunpack.c.l.b16 %v256
      %v312 = vunpack.c.l.b16 %v257
      %v313 = vunpack.c.l.b16 %v258
      %v314 = vunpack.c.l.b16 %v259
      %v315 = vunpack.c.l.b16 %v260
      %v316 = vunpack.c.l.b16 %v261
      %v317 = vunpack.c.l.b16 %v262
      %v318 = vunpack.c.l.b16 %v263
      %v319 = vunpack.c.l.b16 %v264
      %v320 = vunpack.c.l.b16 %v265
      %v321 = vunpack.c.l.b16 %v266
      %v322 = vunpack.c.l.b16 %v267
      %v323 = vunpack.c.l.b16 %v268
      %v324 = vunpack.c.l.b16 %v269
      %v325 = vunpack.c.l.b16 %v270
      %v326 = vunpack.c.l.b16 %v271
      %v327 = vunpack.c.l.b16 %v272
      %v328 = vunpack.c.l.b16 %v273
      %v329 = vunpack.c.l.b16 %v274
      %v330 = vunpack.c.l.b16 %v275
      %v331 = vunpack.c.l.b16 %v276
      %v332 = vunpack.c.l.b16 %v277
      %v333 = vunpack.c.l.b16 %v278
      %v334 = vunpack.c.l.b16 %v279
      %v335 = vunpack.c.l.b16 %v280
      %v336 = vpack.c.b16 %v312, %v311
      %v337 = vpack.c.b16 %v314, %v313
      %v338 = vpack.c.b16 %v316, %v315
      %v339 = vpack.c.b16 %v318, %v317
      %v340 = vpack.c.b16 %v320, %v319
      %v341 = vpack.c.b16 %v322, %v321
      %v342 = vpack.c.b16 %v324, %v323
      %v343 = vpack.c.b16 %v326, %v325
      %v344 = vpack.c.b16 %v328, %v327
      %v345 = vpack.c.b16 %v330, %v329
      %v346 = vpack.c.b16 %v332, %v331
      %v347 = vpack.c.b16 %v334, %v333
      %v348 = vpack.c.b16 %v335, %v335
      %v354 = vunpack.c.l.b16 %v281
      %v355 = vunpack.c.l.b16 %v282
      %v356 = vunpack.c.l.b16 %v283
      %v357 = vunpack.c.l.b16 %v284
      %v358 = vunpack.c.l.b16 %v285
      %v359 = vpack.c.b16 %v355, %v354
      %v360 = vpack.c.b16 %v357, %v356
      %v361 = vpack.c.b16 %v358, %v358
      %vm364 = vcmask 293888
      %v366 = vsel %vm364, %v336, 0
      %v369 = vsel %vm364, %v337, 0
      %v372 = vsel %vm364, %v338, 0
      %v375 = vsel %vm364, %v339, 0
      %v378 = vsel %vm364, %v340, 0
      %v381 = vsel %vm364, %v341, 0
      %v384 = vsel %vm364, %v342, 0
      %v387 = vsel %vm364, %v343, 0
      %v390 = vsel %vm364, %v344, 0
      %v393 = vsel %vm364, %v345, 0
      %v396 = vsel %vm364, %v346, 0
      %v399 = vsel %vm364, %v347, 0
      %v402 = vsel %vm364, %v348, 0
      %vm404 = vcmask 1041408
      %v406 = vsel %vm404, %v361, 0
      %408 = vmatpush.bf16.msra.mxu0 0
      %409 = vmatpush.bf16.msra.mxu0 0
      %410 = vmatpush.bf16.msra.mxu0 0
      %411 = vmatpush.bf16.msra.mxu0 0
      %412 = vmatpush.bf16.msra.mxu0 0
      %413 = vmatpush.bf16.msra.mxu0 %v406
      %414 = vmatpush.bf16.msra.mxu0 %v360
      %415 = vmatpush.bf16.msra.mxu0 %v359
      %416 = vmatmul.bf16.gmra.mxu0 %v366
      %v417 = vpop.f32.mrf.mxu0
      %v418 = vadd.f32 0.0, %v417
      %v419 = vpop.f32.mrf.mxu0
      %v420 = vadd.f32 0.0, %v419
      %421 = vmatmul.bf16.gmra.mxu0 %v369
      %v422 = vpop.f32.mrf.mxu0
      %v423 = vadd.f32 0.0, %v422
      %v424 = vpop.f32.mrf.mxu0
      %v425 = vadd.f32 0.0, %v424
      %426 = vmatmul.bf16.gmra.mxu0 %v372
      %v427 = vpop.f32.mrf.mxu0
      %v428 = vadd.f32 0.0, %v427
      %v429 = vpop.f32.mrf.mxu0
      %v430 = vadd.f32 0.0, %v429
      %431 = vmatmul.bf16.gmra.mxu0 %v375
      %v432 = vpop.f32.mrf.mxu0
      %v433 = vadd.f32 0.0, %v432
      %v434 = vpop.f32.mrf.mxu0
      %v435 = vadd.f32 0.0, %v434
      %436 = vmatmul.bf16.gmra.mxu0 %v378
      %v437 = vpop.f32.mrf.mxu0
      %v438 = vadd.f32 0.0, %v437
      %v439 = vpop.f32.mrf.mxu0
      %v440 = vadd.f32 0.0, %v439
      %441 = vmatmul.bf16.gmra.mxu0 %v381
      %v442 = vpop.f32.mrf.mxu0
      %v443 = vadd.f32 0.0, %v442
      %v444 = vpop.f32.mrf.mxu0
      %v445 = vadd.f32 0.0, %v444
      %446 = vmatmul.bf16.gmra.mxu0 %v384
      %v447 = vpop.f32.mrf.mxu0
      %v448 = vadd.f32 0.0, %v447
      %v449 = vpop.f32.mrf.mxu0
      %v450 = vadd.f32 0.0, %v449
      %451 = vmatmul.bf16.gmra.mxu0 %v387
      %v452 = vpop.f32.mrf.mxu0
      %v453 = vadd.f32 0.0, %v452
      %v454 = vpop.f32.mrf.mxu0
      %v455 = vadd.f32 0.0, %v454
      %456 = vmatmul.bf16.gmra.mxu0 %v390
      %v457 = vpop.f32.mrf.mxu0
      %v458 = vadd.f32 0.0, %v457
      %v459 = vpop.f32.mrf.mxu0
      %v460 = vadd.f32 0.0, %v459
      %461 = vmatmul.bf16.gmra.mxu0 %v393
      %v462 = vpop.f32.mrf.mxu0
      %v463 = vadd.f32 0.0, %v462
      %v464 = vpop.f32.mrf.mxu0
      %v465 = vadd.f32 0.0, %v464
      %466 = vmatmul.bf16.gmra.mxu0 %v396
      %v467 = vpop.f32.mrf.mxu0
      %v468 = vadd.f32 0.0, %v467
      %v469 = vpop.f32.mrf.mxu0
      %v470 = vadd.f32 0.0, %v469
      %471 = vmatmul.bf16.gmra.mxu0 %v399
      %v472 = vpop.f32.mrf.mxu0
      %v473 = vadd.f32 0.0, %v472
      %v474 = vpop.f32.mrf.mxu0
      %v475 = vadd.f32 0.0, %v474
      %476 = vmatmul.bf16.gmra.mxu0 %v402
      %v477 = vpop.f32.mrf.mxu0
      %v478 = vadd.f32 0.0, %v477
      %v479 = vpop.f32.mrf.mxu0
      %480 = vdwg.mxu0
      %v481 = vld [vmem:[%s2] sm:$0x1]
      %s482 = scalar_lea.vmem %s2, 1
      %v483 = vld [vmem:[%s482] sm:$0x1]
      %v484 = vadd.f32 %v481, %v483
      %v485 = vld [vmem:[%s3] sm:$0x1]
      %s486 = scalar_lea.vmem %s3, 1
      %v487 = vld [vmem:[%s486] sm:$0x1]
      %v488 = vadd.f32 %v485, %v487
      %v489 = vmul.f32 %v484, 0.0025510204
      %v490 = vmul.f32 %v488, 0.0025510204
      %v491 = vmul.f32 %v489, %v489
      %v492 = vsub.f32 %v490, %v491
      %v493 = vmax.f32 %v492, 0.0
      %v494 = vld [vmem:[%s4] sm:$0x1]
      %v495 = vadd.f32 %v493, 1e-05
      %v496 = vrsqrt.pop %v495
      %v497 = vmul.f32 %v496, %v495
      %v498 = vmul.f32 %v497, %v496
      %v499 = vmul.f32 0.5, %v498
      %v500 = vsub.f32 1.5, %v499
      %v501 = vmul.f32 %v496, %v500
      %vm502 = vweird.f32 %v495
      %vm503 = vweird.f32 %v496
      %vm504 = vmor %vm502, %vm503
      %v505 = vsel %vm504, %v496, %v501
      %v506 = vmul.f32 %v494, %v505
      %v507 = vld [vmem:[%s5] sm:$0x1]
      %v508 = vmul.f32 %v489, %v506
      %v509 = vsub.f32 %v507, %v508
      %v511 = vperm.slane %v506, 0
      %v513 = vmul.f32 %v418, %v511
      %v514 = vmul.f32 %v420, %v511
      %v515 = vmul.f32 %v423, %v511
      %v516 = vmul.f32 %v425, %v511
      %v517 = vmul.f32 %v428, %v511
      %v518 = vmul.f32 %v430, %v511
      %v519 = vmul.f32 %v433, %v511
      %v520 = vmul.f32 %v435, %v511
      %v521 = vmul.f32 %v438, %v511
      %v522 = vmul.f32 %v440, %v511
      %v523 = vmul.f32 %v443, %v511
      %v524 = vmul.f32 %v445, %v511
      %v525 = vmul.f32 %v448, %v511
      %v526 = vmul.f32 %v450, %v511
      %v527 = vmul.f32 %v453, %v511
      %v528 = vmul.f32 %v455, %v511
      %v529 = vmul.f32 %v458, %v511
      %v530 = vmul.f32 %v460, %v511
      %v531 = vmul.f32 %v463, %v511
      %v532 = vmul.f32 %v465, %v511
      %v533 = vmul.f32 %v468, %v511
      %v534 = vmul.f32 %v470, %v511
      %v535 = vmul.f32 %v473, %v511
      %v536 = vmul.f32 %v475, %v511
      %v537 = vmul.f32 %v478, %v511
      %v539 = vperm.slane %v509, 0
      %v541 = vadd.f32 %v513, %v539
      %v542 = vadd.f32 %v514, %v539
      %v543 = vadd.f32 %v515, %v539
      %v544 = vadd.f32 %v516, %v539
      %v545 = vadd.f32 %v517, %v539
      %v546 = vadd.f32 %v518, %v539
      %v547 = vadd.f32 %v519, %v539
      %v548 = vadd.f32 %v520, %v539
      %v549 = vadd.f32 %v521, %v539
      %v550 = vadd.f32 %v522, %v539
      %v551 = vadd.f32 %v523, %v539
      %v552 = vadd.f32 %v524, %v539
      %v553 = vadd.f32 %v525, %v539
      %v554 = vadd.f32 %v526, %v539
      %v555 = vadd.f32 %v527, %v539
      %v556 = vadd.f32 %v528, %v539
      %v557 = vadd.f32 %v529, %v539
      %v558 = vadd.f32 %v530, %v539
      %v559 = vadd.f32 %v531, %v539
      %v560 = vadd.f32 %v532, %v539
      %v561 = vadd.f32 %v533, %v539
      %v562 = vadd.f32 %v534, %v539
      %v563 = vadd.f32 %v535, %v539
      %v564 = vadd.f32 %v536, %v539
      %v565 = vadd.f32 %v537, %v539
      %v566 = vmax.f32 %v541, 0.0
      %v567 = vmax.f32 %v542, 0.0
      %v568 = vmax.f32 %v543, 0.0
      %v569 = vmax.f32 %v544, 0.0
      %v570 = vmax.f32 %v545, 0.0
      %v571 = vmax.f32 %v546, 0.0
      %v572 = vmax.f32 %v547, 0.0
      %v573 = vmax.f32 %v548, 0.0
      %v574 = vmax.f32 %v549, 0.0
      %v575 = vmax.f32 %v550, 0.0
      %v576 = vmax.f32 %v551, 0.0
      %v577 = vmax.f32 %v552, 0.0
      %v578 = vmax.f32 %v553, 0.0
      %v579 = vmax.f32 %v554, 0.0
      %v580 = vmax.f32 %v555, 0.0
      %v581 = vmax.f32 %v556, 0.0
      %v582 = vmax.f32 %v557, 0.0
      %v583 = vmax.f32 %v558, 0.0
      %v584 = vmax.f32 %v559, 0.0
      %v585 = vmax.f32 %v560, 0.0
      %v586 = vmax.f32 %v561, 0.0
      %v587 = vmax.f32 %v562, 0.0
      %v588 = vmax.f32 %v563, 0.0
      %v589 = vmax.f32 %v564, 0.0
      %v590 = vmax.f32 %v565, 0.0
      %591 = vst [vmem:[%s253] sm:$0xff] %v566
      %592 = vst [vmem:[%s253 + $0x8] sm:$0xff] %v567
      %593 = vst [vmem:[%s253 + $0x10] sm:$0xff] %v568
      %594 = vst [vmem:[%s253 + $0x18] sm:$0xff] %v569
      %595 = vst [vmem:[%s253 + $0x20] sm:$0xff] %v570
      %596 = vst [vmem:[%s253 + $0x28] sm:$0xff] %v571
      %597 = vst [vmem:[%s253 + $0x30] sm:$0xff] %v572
      %598 = vst [vmem:[%s253 + $0x38] sm:$0xff] %v573
      %599 = vst [vmem:[%s253 + $0x40] sm:$0xff] %v574
      %600 = vst [vmem:[%s253 + $0x48] sm:$0xff] %v575
      %601 = vst [vmem:[%s253 + $0x50] sm:$0xff] %v576
      %602 = vst [vmem:[%s253 + $0x58] sm:$0xff] %v577
      %603 = vst [vmem:[%s253 + $0x60] sm:$0xff] %v578
      %604 = vst [vmem:[%s253 + $0x68] sm:$0xff] %v579
      %605 = vst [vmem:[%s253 + $0x70] sm:$0xff] %v580
      %606 = vst [vmem:[%s253 + $0x78] sm:$0xff] %v581
      %607 = vst [vmem:[%s253 + $0x80] sm:$0xff] %v582
      %608 = vst [vmem:[%s253 + $0x88] sm:$0xff] %v583
      %609 = vst [vmem:[%s253 + $0x90] sm:$0xff] %v584
      %610 = vst [vmem:[%s253 + $0x98] sm:$0xff] %v585
      %611 = vst [vmem:[%s253 + $0xa0] sm:$0xff] %v586
      %612 = vst [vmem:[%s253 + $0xa8] sm:$0xff] %v587
      %613 = vst [vmem:[%s253 + $0xb0] sm:$0xff] %v588
      %614 = vst [vmem:[%s253 + $0xb8] sm:$0xff] %v589
      %615 = vst [vmem:[%s253 + $0xc0] sm:$0xff] %v590
      %s616 = smul.u32 25, %s17
      %p617 = scmp.lt.s32.totalorder %s616, 49
      %s618 = scalar_select %p617, %s616, 49
      %s619 = smul.addr %s618, 8
      %s620 = scalar_lea.vmem %s6, %s619
      // Predicated region
      $region45: #{cbr_forward.3} parent=43 // pred_check
        %p621 = pneg %p166
      $region46: #{cbr_forward.3} parent=43 // pred_check_branch
        %623 = sbr.rel (%p621) target = $region48
      $region47: #{cbr_forward.3} parent=43 // pred_region
        %s624 = smul.u32 25, %s17
      $region48: #{cbr_forward.3} parent=43 // pred_fallthru
        _
    $region44: #{cbr_forward.3} parent=5 // pred_fallthru
      _
    %p625 = scmp.le.s32.totalorder 2, %s12
    // Predicated region
    $region49: #{cbr_forward.3} parent=5 // pred_check
      %p626 = pneg %p625
    $region50: #{cbr_forward.3} parent=5 // pred_check_branch
      %628 = sbr.rel (%p626) target = $region52
    $region51: #{cbr_forward.3} parent=5 // pred_region
      %s629 = ssub.s32 %s12, 2
      // Predicated region
      $region53: #{cbr_forward.3} parent=51 // pred_check
        %p630 = pneg %p172
      $region54: #{cbr_forward.3} parent=51 // pred_check_branch
        %632 = sbr.rel (%p630) target = $region56
      $region55: #{cbr_forward.3} parent=51 // pred_region
        %s633 = smul.u32 25, %s18
        %p634 = scmp.lt.s32.totalorder %s633, 49
        %s635 = scalar_select %p634, %s633, 49
        %s636 = smul.addr %s635, 8
        %s637 = scalar_lea.vmem %s6, %s636
      $region56: #{cbr_forward.3} parent=51 // pred_fallthru
        _
    $region52: #{cbr_forward.3} parent=5 // pred_fallthru
      _
  $region6: #{cbr_forward.3} parent=0 // loop_footer
    %s16 = sadd.s32 1, %s12
  $region7: #{cbr_forward.3} parent=0 // loop_footer_branch
    %11 = sbr.rel target = $region3
  $region8: #{cbr_forward.3} parent=0 // loop_exit
    _

</llo_original>
